<compile_context>
chip_gen: v6e
topology: v6e:2x2x1
jax: 0.10.0
libtpu: 0.0.40
codegen_flags: <defaults>
</compile_context>

<pallas_src>
import jax
import jax.numpy as jnp
from jax import lax
from jax.experimental import pallas as pl
from jax.experimental.pallas import tpu as pltpu

LANE = 128


def _round_up(x, m):
    return (x + m - 1) // m * m


def _conv_relu_bn_kernel(p_ref, w_ref, prm_ref, o_ref):
    """One (image, spatial-tile) per grid step.

    p_ref:   (1, Kp, TS)  im2col patch slab (contraction rows x spatial columns)
    w_ref:   (Cp, Kp)     weight slab, resident across the grid
    prm_ref: (Cp, LANE)   column 0 = conv bias, 1 = BN scale, 2 = BN shift
    o_ref:   (1, Cp, TS)  output tile (channel-major -> NCHW without a transpose)
    """
    # Single full-contraction MXU GEMM; accumulation stays inside MXU f32 accumulators.
    acc = jnp.dot(w_ref[...], p_ref[0], preferred_element_type=jnp.float32)  # (Cp, TS)
    cbias = prm_ref[:, 0:1]   # (Cp, 1) broadcast along the spatial (lane) dim
    scale = prm_ref[:, 1:2]
    shift = prm_ref[:, 2:3]
    o = jnp.maximum(acc + cbias, 0.0) * scale + shift
    o_ref[0] = o.astype(o_ref.dtype)


@jax.jit
def conv_relu_bn(x, weight, bias, gamma, beta, running_mean, running_var, eps=1e-5):
    """x: (N, Cin, H, W) f32 -> (N, Cout, H, W) f32. Conv2d(k,1,pad=(k-1)//2)+ReLU+BN(eval)."""
    N, Cin, H, W = x.shape
    Cout, Cin_w, K, K2 = weight.shape
    assert Cin_w == Cin and K == K2
    pad = (K - 1) // 2
    HW = H * W
    KKC = K * K * Cin
    Kp = _round_up(KKC, LANE)      # padded contraction dim (>= 128, lane/sublane aligned)
    Cp = _round_up(Cout, LANE)     # padded output channels

    # ---- spatial tile size: largest lane-dense tile fitting a conservative VMEM budget
    TS_UNIT = 256                  # MXU output width on v6e/v7x; multiple of 128
    budget = 24 << 20              # bytes for pipelined blocks (safe on v7x's 64 MiB)
    per_col = (Kp + Cp) * 4 * 2    # double-buffered patch + output bytes per spatial col
    ts_cap = max(TS_UNIT, (budget // per_col) // TS_UNIT * TS_UNIT)
    TS = int(min(_round_up(HW, TS_UNIT), ts_cap, 8192))
    HWt = _round_up(HW, TS)
    n_tiles = HWt // TS

    # ----------------------------- layout glue (plain JAX) -----------------------------
    # im2col: rows ordered (kh, kw, cin); columns are flattened spatial positions.
    xp = jnp.pad(x, ((0, 0), (0, 0), (pad, pad), (pad, pad)))
    taps = [xp[:, :, kh:kh + H, kw:kw + W] for kh in range(K) for kw in range(K)]
    patches = jnp.stack(taps, axis=1).reshape(N, KKC, HW)          # (N, K*K*Cin, H*W)
    patches = jnp.pad(patches, ((0, 0), (0, Kp - KKC), (0, HWt - HW)))

    # (Cout, Cin, K, K) -> (Cp, Kp) matching the (kh, kw, cin) row order above.
    w_slab = jnp.transpose(weight, (0, 2, 3, 1)).reshape(Cout, KKC)
    w_slab = jnp.pad(w_slab, ((0, Cp - Cout), (0, Kp - KKC)))

    # Fold eval-mode BatchNorm into per-channel scale/shift; pack bias/scale/shift
    # into one resident (Cp, 128) array (columns 0/1/2).
    scale = gamma / jnp.sqrt(running_var + eps)
    shift = beta - running_mean * scale
    params = jnp.zeros((Cp, LANE), jnp.float32)
    params = params.at[:Cout, 0].set(bias)
    params = params.at[:Cout, 1].set(scale)
    params = params.at[:Cout, 2].set(shift)

    need = (2 * (Kp * TS + Cp * TS) + Cp * Kp + Cp * LANE) * 4
    vmem_limit = int(min(max(2 * need, 32 << 20), 56 << 20))

    out = pl.pallas_call(
        _conv_relu_bn_kernel,
        out_shape=jax.ShapeDtypeStruct((N, Cp, HWt), x.dtype),
        grid=(N, n_tiles),
        in_specs=[
            pl.BlockSpec((1, Kp, TS), lambda n, t: (n, 0, t)),   # patch tile
            pl.BlockSpec((Cp, Kp), lambda n, t: (0, 0)),         # weights resident
            pl.BlockSpec((Cp, LANE), lambda n, t: (0, 0)),       # packed bias/scale/shift
        ],
        out_specs=pl.BlockSpec((1, Cp, TS), lambda n, t: (n, 0, t)),
        compiler_params=pltpu.CompilerParams(
            dimension_semantics=("parallel", "parallel"),
            vmem_limit_bytes=vmem_limit,
        ),
    )(patches, w_slab, params)

    # Output is already channel-major: just drop channel/spatial padding, no transpose.
    return out[:, :Cout, :HW].reshape(N, Cout, H, W)


# ----------------------------- pure-JAX reference -----------------------------

def reference(x, weight, bias, gamma, beta, running_mean, running_var, eps=1e-5):
    K = weight.shape[-1]
    pad = (K - 1) // 2
    o = lax.conv_general_dilated(
        x, weight, window_strides=(1, 1), padding=((pad, pad), (pad, pad)),
        dimension_numbers=("NCHW", "OIHW", "NCHW"),
        precision=lax.Precision.HIGHEST)
    o = o + bias[None, :, None, None]
    o = jnp.maximum(o, 0.0)
    inv = gamma / jnp.sqrt(running_var + eps)
    o = (o - running_mean[None, :, None, None]) * inv[None, :, None, None] \
        + beta[None, :, None, None]
    return o


if __name__ == "__main__":
    N, Cin, H, W = 2, 4, 16, 16
    Cout, K = 8, 5

    key = jax.random.PRNGKey(0)
    k1, k2, k3, k4, k5, k6, k7 = jax.random.split(key, 7)
    x = jax.random.normal(k1, (N, Cin, H, W), jnp.float32)

    bound = 1.0 / jnp.sqrt(jnp.float32(Cin * K * K))
    weight = jax.random.uniform(k2, (Cout, Cin, K, K), jnp.float32, -bound, bound)
    bias = jax.random.uniform(k3, (Cout,), jnp.float32, -bound, bound)
    gamma = jax.random.uniform(k4, (Cout,), jnp.float32, 0.5, 1.5)
    beta = jax.random.uniform(k5, (Cout,), jnp.float32, -0.5, 0.5)
    running_mean = jax.random.uniform(k6, (Cout,), jnp.float32, -0.5, 0.5)
    running_var = jax.random.uniform(k7, (Cout,), jnp.float32, 0.5, 1.5)

    out = conv_relu_bn(x, weight, bias, gamma, beta, running_mean, running_var)
    out = jax.block_until_ready(out)

    ref = jax.block_until_ready(
        reference(x, weight, bias, gamma, beta, running_mean, running_var))
    assert out.shape == (N, Cout, H, W)
    assert jnp.allclose(out, ref, atol=1e-4, rtol=1e-4), float(jnp.max(jnp.abs(out - ref)))

    print("KERNEL_OK")
</pallas_src>

<mosaic_0001>
module attributes {stable_mosaic.version = 11 : i64} {
  func.func @_conv_relu_bn_kernel(%arg0: i32, %arg1: i32, %arg2: memref<1x128x256xf32, #tpu.memory_space<vmem>>, %arg3: memref<128x128xf32, #tpu.memory_space<vmem>>, %arg4: memref<128x128xf32, #tpu.memory_space<vmem>>, %arg5: memref<1x128x256xf32, #tpu.memory_space<vmem>>) attributes {dimension_semantics = [#tpu.dimension_semantics<parallel>, #tpu.dimension_semantics<parallel>], iteration_bounds = array<i64: 2, 1>, scalar_prefetch = 0 : i64, scratch_operands = 0 : i64, tpu.core_type = #tpu.core_type<tc>, window_params = [{transform_indices = @transform_0, window_bounds = array<i64: 1, 128, 256>}, {pipeline_mode = #tpu.pipeline_mode<synchronous>, transform_indices = @transform_1, window_bounds = array<i64: 128, 128>}, {pipeline_mode = #tpu.pipeline_mode<synchronous>, transform_indices = @transform_2, window_bounds = array<i64: 128, 128>}, {transform_indices = @transform_3, window_bounds = array<i64: 1, 128, 256>}]} {
    %c0 = arith.constant 0 : index
    %c0_0 = arith.constant 0 : index
    %0 = vector.load %arg3[%c0, %c0_0] : memref<128x128xf32, #tpu.memory_space<vmem>>, vector<128x128xf32>
    %c0_1 = arith.constant 0 : index
    %c0_2 = arith.constant 0 : index
    %c0_3 = arith.constant 0 : index
    %1 = vector.load %arg2[%c0_1, %c0_2, %c0_3] : memref<1x128x256xf32, #tpu.memory_space<vmem>>, vector<1x128x256xf32>
    %2 = vector.shape_cast %1 : vector<1x128x256xf32> to vector<128x256xf32>
    %cst = arith.constant dense<0.000000e+00> : vector<128x256xf32>
    %3 = tpu.matmul %0, %2, %cst {dimension_numbers = #tpu.dot_dimension_numbers<[1], [0], [0], [1], [0, 0, 1, 1], [], []>} : vector<128x128xf32>, vector<128x256xf32>, vector<128x256xf32> -> vector<128x256xf32>
    %c0_4 = arith.constant 0 : index
    %c0_5 = arith.constant 0 : index
    %4 = vector.load %arg4[%c0_4, %c0_5] : memref<128x128xf32, #tpu.memory_space<vmem>>, vector<128x1xf32>
    %c0_6 = arith.constant 0 : index
    %c1 = arith.constant 1 : index
    %5 = vector.load %arg4[%c0_6, %c1] : memref<128x128xf32, #tpu.memory_space<vmem>>, vector<128x1xf32>
    %c0_7 = arith.constant 0 : index
    %c2 = arith.constant 2 : index
    %6 = vector.load %arg4[%c0_7, %c2] : memref<128x128xf32, #tpu.memory_space<vmem>>, vector<128x1xf32>
    %7 = vector.broadcast %4 : vector<128x1xf32> to vector<128x256xf32>
    %8 = arith.addf %3, %7 : vector<128x256xf32>
    %cst_8 = arith.constant 0.000000e+00 : f32
    %9 = vector.broadcast %cst_8 : f32 to vector<128x256xf32>
    %10 = arith.maximumf %8, %9 : vector<128x256xf32>
    %11 = vector.broadcast %5 : vector<128x1xf32> to vector<128x256xf32>
    %12 = arith.mulf %10, %11 : vector<128x256xf32>
    %13 = vector.broadcast %6 : vector<128x1xf32> to vector<128x256xf32>
    %14 = arith.addf %12, %13 : vector<128x256xf32>
    %c0_9 = arith.constant 0 : index
    %c0_10 = arith.constant 0 : index
    %c0_11 = arith.constant 0 : index
    %15 = vector.load %arg5[%c0_9, %c0_10, %c0_11] : memref<1x128x256xf32, #tpu.memory_space<vmem>>, vector<1x128x256xf32>
    %16 = vector.shape_cast %15 : vector<1x128x256xf32> to vector<128x256xf32>
    %17 = vector.shape_cast %14 : vector<128x256xf32> to vector<1x128x256xf32>
    tpu.vector_store %arg5[%c0_9, %c0_10, %c0_11], %17 {strides = array<i32>} : memref<1x128x256xf32, #tpu.memory_space<vmem>>, vector<1x128x256xf32>,
    return
  }
  func.func @transform_0(%arg0: i32, %arg1: i32) -> (i32, i32, i32) {
    %c0_i32 = arith.constant 0 : i32
    %c0_i32_0 = arith.constant 0 : i32
    return %arg0, %c0_i32, %arg1 : i32, i32, i32
  }
  func.func @transform_1(%arg0: i32, %arg1: i32) -> (i32, i32) {
    %c0_i32 = arith.constant 0 : i32
    %c0_i32_0 = arith.constant 0 : i32
    %c0_i32_1 = arith.constant 0 : i32
    return %c0_i32, %c0_i32_0 : i32, i32
  }
  func.func @transform_2(%arg0: i32, %arg1: i32) -> (i32, i32) {
    %c0_i32 = arith.constant 0 : i32
    %c0_i32_0 = arith.constant 0 : i32
    %c0_i32_1 = arith.constant 0 : i32
    return %c0_i32, %c0_i32_0 : i32, i32
  }
  func.func @transform_3(%arg0: i32, %arg1: i32) -> (i32, i32, i32) {
    %c0_i32 = arith.constant 0 : i32
    %c0_i32_0 = arith.constant 0 : i32
    return %arg0, %c0_i32, %arg1 : i32, i32, i32
  }
}

</mosaic_0001>

<llo_original>
// kernel: conv_relu_bn.1
$region0: #{conv_relu_bn.1}
  #allocation0 [shape = 'u32[]', space=smem, size = 0x4, offset = 0x4, fixed_abs, tag = 'smem constant byte address 0x4 - core index']
  #allocation1 [shape = 'u32[144,128]{1,0:T(1,128)}', space=vmem, size = 0x12000, scoped, tag = 'internal scratch']
  %s0 = inlined_call_operand.vmem [shape: f32[2,128,256], index: 0, kind: input, shape index: {}]
  %s1 = inlined_call_operand.vmem [shape: f32[128,128], index: 1, kind: input, shape index: {}]
  %s2 = inlined_call_operand.vmem [shape: f32[128,128], index: 2, kind: input, shape index: {}]
  %s3 = inlined_call_operand.vmem [shape: f32[2,128,256], index: 3, kind: output, shape index: {}]
  %s4 = sld [smem:[#allocation0]]
  $region45: #{conv_relu_bn.1} parent=0
    _
  %s6 = ssub.s32 1, %s4
  %s7 = scalar_select 0, %s6, %s4
  loop: start=0, step=1, limit=4
  $region2: #{conv_relu_bn.1} parent=0 // loop_pre_header
    _
  $region3: #{conv_relu_bn.1} parent=0 // loop_header
    %s9 = sphi 0, %s13
    %p10 = scmp.ge.s32.totalorder %s9, 4
    %s16 = sphi 0, %s28
    %s17 = sphi 0, %s24
    %s18 = sphi 0, %s16
    %s19 = sphi 0, %s17
    %s20 = sphi 0, %s18
    %s21 = sphi 0, %s19
    %s33 = sphi 0, %s35
    %s36 = sphi 0, %s33
    %s37 = sphi 0, %s36
    %s53 = sphi 0, %s37
    %s57 = sphi 0, %s57
    %s59 = sphi 0, %s57
    %s60 = sphi 0, %s59
    %s74 = sphi 0, %s60
    %s78 = sphi 0, %s78
    %s80 = sphi 0, %s78
    %s81 = sphi 0, %s80
    %s95 = sphi 0, %s81
    %s103 = sphi 0, %s105
    %s106 = sphi 0, %s103
    %s107 = sphi 0, %s106
    %s123 = sphi 0, %s107
  $region4: #{conv_relu_bn.1} parent=0 // loop_header_branch
    %12 = sbr.rel (%p10) target = $region8
  $region5: #{conv_relu_bn.1} parent=0 // loop_body
    %s14 = ssub.s32 %s9, 1
    %s15 = ssub.s32 %s9, 2
    %s22 = sadd.s32 1, %s17
    %p23 = scmp.ge.s32.totalorder %s22, 1
    %s24 = scalar_select %p23, 0, %s22
    %s25 = sadd.s32 1, %s16
    %s26 = scalar_select %p23, %s25, %s16
    %p27 = scmp.ge.s32.totalorder %s26, 2
    %s28 = scalar_select %p27, 0, %s26
    %s29 = ssub.s32 %s16, %s28
    %s30 = ssub.s32 %s17, %s24
    %s31 = sor.u32 %s29, %s30
    %p32 = scmp.eq.s32.totalorder %s31, 0
    %s34 = sadd.s32 %s33, 1
    %s35 = scalar_select %p32, %s33, %s34
    %p38 = pneg %p32
    %p39 = scmp.eq.s32.totalorder %s9, 1
    %p40 = por %p38, %p39
    %p41 = scmp.ne.s32.totalorder %s33, %s36
    %p42 = scmp.eq.s32.totalorder %s9, 0
    %p43 = por %p41, %p42
    %p44 = scmp.ne.s32.totalorder %s33, %s36
    %p45 = scmp.eq.s32.totalorder %s14, 1
    %p46 = por %p44, %p45
    %p47 = scmp.ne.s32.totalorder %s36, %s37
    %p48 = scmp.eq.s32.totalorder %s14, 0
    %p49 = por %p47, %p48
    %p50 = scmp.ne.s32.totalorder %s36, %s37
    %p51 = scmp.eq.s32.totalorder %s15, 1
    %p52 = por %p50, %p51
    %p54 = scmp.ne.s32.totalorder %s37, %s53
    %p55 = scmp.eq.s32.totalorder %s15, 0
    %p56 = por %p54, %p55
    %s58 = sadd.s32 %s57, 1
    %p61 = scmp.eq.s32.totalorder %s9, 1
    %p62 = scmp.ne.s32.totalorder %s57, %s59
    %p63 = scmp.eq.s32.totalorder %s9, 0
    %p64 = por %p62, %p63
    %p65 = scmp.ne.s32.totalorder %s57, %s59
    %p66 = scmp.eq.s32.totalorder %s14, 1
    %p67 = por %p65, %p66
    %p68 = scmp.ne.s32.totalorder %s59, %s60
    %p69 = scmp.eq.s32.totalorder %s14, 0
    %p70 = por %p68, %p69
    %p71 = scmp.ne.s32.totalorder %s59, %s60
    %p72 = scmp.eq.s32.totalorder %s15, 1
    %p73 = por %p71, %p72
    %p75 = scmp.ne.s32.totalorder %s60, %s74
    %p76 = scmp.eq.s32.totalorder %s15, 0
    %p77 = por %p75, %p76
    %s79 = sadd.s32 %s78, 1
    %p82 = scmp.eq.s32.totalorder %s9, 1
    %p83 = scmp.ne.s32.totalorder %s78, %s80
    %p84 = scmp.eq.s32.totalorder %s9, 0
    %p85 = por %p83, %p84
    %p86 = scmp.ne.s32.totalorder %s78, %s80
    %p87 = scmp.eq.s32.totalorder %s14, 1
    %p88 = por %p86, %p87
    %p89 = scmp.ne.s32.totalorder %s80, %s81
    %p90 = scmp.eq.s32.totalorder %s14, 0
    %p91 = por %p89, %p90
    %p92 = scmp.ne.s32.totalorder %s80, %s81
    %p93 = scmp.eq.s32.totalorder %s15, 1
    %p94 = por %p92, %p93
    %p96 = scmp.ne.s32.totalorder %s81, %s95
    %p97 = scmp.eq.s32.totalorder %s15, 0
    %p98 = por %p96, %p97
    %s99 = ssub.s32 %s16, %s28
    %s100 = ssub.s32 %s17, %s24
    %s101 = sor.u32 %s99, %s100
    %p102 = scmp.eq.s32.totalorder %s101, 0
    %s104 = sadd.s32 %s103, 1
    %s105 = scalar_select %p102, %s103, %s104
    %p108 = pneg %p102
    %p109 = scmp.eq.s32.totalorder %s9, 1
    %p110 = por %p108, %p109
    %p111 = scmp.ne.s32.totalorder %s103, %s106
    %p112 = scmp.eq.s32.totalorder %s9, 0
    %p113 = por %p111, %p112
    %p114 = scmp.ne.s32.totalorder %s103, %s106
    %p115 = scmp.eq.s32.totalorder %s14, 1
    %p116 = por %p114, %p115
    %p117 = scmp.ne.s32.totalorder %s106, %s107
    %p118 = scmp.eq.s32.totalorder %s14, 0
    %p119 = por %p117, %p118
    %p120 = scmp.ne.s32.totalorder %s106, %s107
    %p121 = scmp.eq.s32.totalorder %s15, 1
    %p122 = por %p120, %p121
    %p124 = scmp.ne.s32.totalorder %s107, %s123
    %p125 = scmp.eq.s32.totalorder %s15, 0
    %p126 = por %p124, %p125
    %p127 = scmp.le.s32.totalorder 1, %s9
    %p128 = scmp.lt.s32.totalorder %s9, 3
    %p129 = pnand %p127, %p128
    %p130 = pneg %p129
    // Predicated region
    $region9: #{conv_relu_bn.1} parent=5 // pred_check
      _
    $region10: #{conv_relu_bn.1} parent=5 // pred_check_branch
      %132 = sbr.rel (%p129) target = $region12
    $region11: #{conv_relu_bn.1} parent=5 // pred_region
      %s133 = ssub.s32 %s9, 1
      // Predicated region
      $region13: #{conv_relu_bn.1} parent=11 // pred_check
        %p134 = pneg %p70
      $region14: #{conv_relu_bn.1} parent=11 // pred_check_branch
        %136 = sbr.rel (%p134) target = $region16
      $region15: #{conv_relu_bn.1} parent=11 // pred_region
        _
      $region16: #{conv_relu_bn.1} parent=11 // pred_fallthru
        _
      // Predicated region
      $region17: #{conv_relu_bn.1} parent=11 // pred_check
        %p137 = pneg %p91
      $region18: #{conv_relu_bn.1} parent=11 // pred_check_branch
        %139 = sbr.rel (%p137) target = $region20
      $region19: #{conv_relu_bn.1} parent=11 // pred_region
        _
      $region20: #{conv_relu_bn.1} parent=11 // pred_fallthru
        _
    $region12: #{conv_relu_bn.1} parent=5 // pred_fallthru
      _
    %p140 = scmp.lt.s32.totalorder %s9, 2
    // Predicated region
    $region21: #{conv_relu_bn.1} parent=5 // pred_check
      %p141 = pneg %p140
    $region22: #{conv_relu_bn.1} parent=5 // pred_check_branch
      %143 = sbr.rel (%p141) target = $region24
    $region23: #{conv_relu_bn.1} parent=5 // pred_region
      // Predicated region
      $region25: #{conv_relu_bn.1} parent=23 // pred_check
        %p144 = pneg %p43
      $region26: #{conv_relu_bn.1} parent=23 // pred_check_branch
        %146 = sbr.rel (%p144) target = $region28
      $region27: #{conv_relu_bn.1} parent=23 // pred_region
        %s147 = smul.u32 2, %s17
        %p148 = scmp.lt.s32.totalorder %s16, 1
        %s149 = scalar_select %p148, %s16, 1
        %p150 = scmp.lt.s32.totalorder %s147, 1
        %s151 = scalar_select %p150, %s147, 1
        %s152 = smul.addr %s149, 32
        %s153 = sadd.s32 %s151, %s152
        %s154 = smul.addr %s153, 8
        %s155 = scalar_lea.vmem %s0, %s154
        %s156 = smul.u32 2, %s17
      $region28: #{conv_relu_bn.1} parent=23 // pred_fallthru
        _
    $region24: #{conv_relu_bn.1} parent=5 // pred_fallthru
      _
    %p157 = scmp.le.s32.totalorder 1, %s9
    %p158 = scmp.lt.s32.totalorder %s9, 3
    %p159 = pnand %p157, %p158
    %p160 = pneg %p159
    // Predicated region
    $region29: #{conv_relu_bn.1} parent=5 // pred_check
      _
    $region30: #{conv_relu_bn.1} parent=5 // pred_check_branch
      %162 = sbr.rel (%p159) target = $region32
    $region31: #{conv_relu_bn.1} parent=5 // pred_region
      %s163 = ssub.s32 %s9, 1
      %s164 = smul.u32 2, %s19
      %p165 = scmp.lt.s32.totalorder %s18, 1
      %s166 = scalar_select %p165, %s18, 1
      %p167 = scmp.lt.s32.totalorder %s164, 1
      %s168 = scalar_select %p167, %s164, 1
      %s169 = smul.addr %s166, 32
      %s170 = sadd.s32 %s168, %s169
      %s171 = smul.addr %s170, 8
      %s172 = scalar_lea.vmem %s0, %s171
      %p173 = pneg %p49
      %p174 = pneg %p46
      %p175 = pneg %p70
      %p176 = pneg %p67
      %p177 = pneg %p91
      %p178 = pneg %p88
      %p179 = pneg %p119
      %p180 = pneg %p116
      %s181 = smul.u32 2, %s19
      %p182 = scmp.lt.s32.totalorder %s18, 1
      %s183 = scalar_select %p182, %s18, 1
      %p184 = scmp.lt.s32.totalorder %s181, 1
      %s185 = scalar_select %p184, %s181, 1
      %s186 = smul.addr %s183, 32
      %s187 = sadd.s32 %s185, %s186
      %s188 = smul.addr %s187, 8
      %s189 = scalar_lea.vmem %s3, %s188
      %s190 = smul.u32 2, %s19
      %p191 = scmp.lt.s32.totalorder %s18, 1
      %s192 = scalar_select %p191, %s18, 1
      %p193 = scmp.lt.s32.totalorder %s190, 1
      %s194 = scalar_select %p193, %s190, 1
      %s195 = smul.addr %s192, 32
      %s196 = sadd.s32 %s194, %s195
      %s197 = smul.addr %s196, 8
      %s198 = scalar_lea.vmem %s0, %s197
      %s199 = smul.u32 2, %s19
      %s200 = smul.u32 2, %s19
      %p201 = scmp.lt.s32.totalorder %s18, 1
      %s202 = scalar_select %p201, %s18, 1
      %p203 = scmp.lt.s32.totalorder %s200, 1
      %s204 = scalar_select %p203, %s200, 1
      %s205 = smul.addr %s202, 32
      %s206 = sadd.s32 %s204, %s205
      %s207 = smul.addr %s206, 8
      %s208 = scalar_lea.vmem %s3, %s207
      %s209 = smul.u32 2, %s19
      %v210 = vld [vmem:[%s1] sm:$0xff]
      %v211 = vld [vmem:[%s1 + $0x8] sm:$0xff]
      %v212 = vld [vmem:[%s1 + $0x10] sm:$0xff]
      %v213 = vld [vmem:[%s1 + $0x18] sm:$0xff]
      %v214 = vld [vmem:[%s1 + $0x20] sm:$0xff]
      %v215 = vld [vmem:[%s1 + $0x28] sm:$0xff]
      %v216 = vld [vmem:[%s1 + $0x30] sm:$0xff]
      %v217 = vld [vmem:[%s1 + $0x38] sm:$0xff]
      %v218 = vld [vmem:[%s1 + $0x40] sm:$0xff]
      %v219 = vld [vmem:[%s1 + $0x48] sm:$0xff]
      %v220 = vld [vmem:[%s1 + $0x50] sm:$0xff]
      %v221 = vld [vmem:[%s1 + $0x58] sm:$0xff]
      %v222 = vld [vmem:[%s1 + $0x60] sm:$0xff]
      %v223 = vld [vmem:[%s1 + $0x68] sm:$0xff]
      %v224 = vld [vmem:[%s1 + $0x70] sm:$0xff]
      %v225 = vld [vmem:[%s1 + $0x78] sm:$0xff]
      %v226 = vld [vmem:[%s198] sm:$0xff]
      %v227 = vld [vmem:[%s198 + $0x8] sm:$0xff]
      %v228 = vld [vmem:[%s198 + $0x10] sm:$0xff]
      %v229 = vld [vmem:[%s198 + $0x18] sm:$0xff]
      %v230 = vld [vmem:[%s198 + $0x20] sm:$0xff]
      %v231 = vld [vmem:[%s198 + $0x28] sm:$0xff]
      %v232 = vld [vmem:[%s198 + $0x30] sm:$0xff]
      %v233 = vld [vmem:[%s198 + $0x38] sm:$0xff]
      %v234 = vld [vmem:[%s198 + $0x40] sm:$0xff]
      %v235 = vld [vmem:[%s198 + $0x48] sm:$0xff]
      %v236 = vld [vmem:[%s198 + $0x50] sm:$0xff]
      %v237 = vld [vmem:[%s198 + $0x58] sm:$0xff]
      %v238 = vld [vmem:[%s198 + $0x60] sm:$0xff]
      %v239 = vld [vmem:[%s198 + $0x68] sm:$0xff]
      %v240 = vld [vmem:[%s198 + $0x70] sm:$0xff]
      %v241 = vld [vmem:[%s198 + $0x78] sm:$0xff]
      %v242 = vld [vmem:[%s198 + $0x80] sm:$0xff]
      %v243 = vld [vmem:[%s198 + $0x88] sm:$0xff]
      %v244 = vld [vmem:[%s198 + $0x90] sm:$0xff]
      %v245 = vld [vmem:[%s198 + $0x98] sm:$0xff]
      %v246 = vld [vmem:[%s198 + $0xa0] sm:$0xff]
      %v247 = vld [vmem:[%s198 + $0xa8] sm:$0xff]
      %v248 = vld [vmem:[%s198 + $0xb0] sm:$0xff]
      %v249 = vld [vmem:[%s198 + $0xb8] sm:$0xff]
      %v250 = vld [vmem:[%s198 + $0xc0] sm:$0xff]
      %v251 = vld [vmem:[%s198 + $0xc8] sm:$0xff]
      %v252 = vld [vmem:[%s198 + $0xd0] sm:$0xff]
      %v253 = vld [vmem:[%s198 + $0xd8] sm:$0xff]
      %v254 = vld [vmem:[%s198 + $0xe0] sm:$0xff]
      %v255 = vld [vmem:[%s198 + $0xe8] sm:$0xff]
      %v256 = vld [vmem:[%s198 + $0xf0] sm:$0xff]
      %v257 = vld [vmem:[%s198 + $0xf8] sm:$0xff]
      %v258 = vld [vmem:[%s2] sm:$0xff]
      %v259 = vld [vmem:[%s2 + $0x8] sm:$0xff]
      %v260 = vld [vmem:[%s2 + $0x10] sm:$0xff]
      %v261 = vld [vmem:[%s2 + $0x18] sm:$0xff]
      %v262 = vld [vmem:[%s2 + $0x20] sm:$0xff]
      %v263 = vld [vmem:[%s2 + $0x28] sm:$0xff]
      %v264 = vld [vmem:[%s2 + $0x30] sm:$0xff]
      %v265 = vld [vmem:[%s2 + $0x38] sm:$0xff]
      %v266 = vld [vmem:[%s2 + $0x40] sm:$0xff]
      %v267 = vld [vmem:[%s2 + $0x48] sm:$0xff]
      %v268 = vld [vmem:[%s2 + $0x50] sm:$0xff]
      %v269 = vld [vmem:[%s2 + $0x58] sm:$0xff]
      %v270 = vld [vmem:[%s2 + $0x60] sm:$0xff]
      %v271 = vld [vmem:[%s2 + $0x68] sm:$0xff]
      %v272 = vld [vmem:[%s2 + $0x70] sm:$0xff]
      %v273 = vld [vmem:[%s2 + $0x78] sm:$0xff]
      %275 = vset.pattern.permute.xlu0 0
      %276 = vperm.xlu0 %275, %v258
      %v277 = vpop.permute.xlu0 %276
      %280 = vset.pattern.permute.xlu0 0
      %281 = vperm.xlu0 %280, %v259
      %v282 = vpop.permute.xlu0 %281
      %285 = vset.pattern.permute.xlu0 0
      %286 = vperm.xlu0 %285, %v260
      %v287 = vpop.permute.xlu0 %286
      %290 = vset.pattern.permute.xlu0 0
      %291 = vperm.xlu0 %290, %v261
      %v292 = vpop.permute.xlu0 %291
      %295 = vset.pattern.permute.xlu0 0
      %296 = vperm.xlu0 %295, %v262
      %v297 = vpop.permute.xlu0 %296
      %300 = vset.pattern.permute.xlu0 0
      %301 = vperm.xlu0 %300, %v263
      %v302 = vpop.permute.xlu0 %301
      %305 = vset.pattern.permute.xlu0 0
      %306 = vperm.xlu0 %305, %v264
      %v307 = vpop.permute.xlu0 %306
      %310 = vset.pattern.permute.xlu0 0
      %311 = vperm.xlu0 %310, %v265
      %v312 = vpop.permute.xlu0 %311
      %315 = vset.pattern.permute.xlu0 0
      %316 = vperm.xlu0 %315, %v266
      %v317 = vpop.permute.xlu0 %316
      %320 = vset.pattern.permute.xlu0 0
      %321 = vperm.xlu0 %320, %v267
      %v322 = vpop.permute.xlu0 %321
      %325 = vset.pattern.permute.xlu0 0
      %326 = vperm.xlu0 %325, %v268
      %v327 = vpop.permute.xlu0 %326
      %330 = vset.pattern.permute.xlu0 0
      %331 = vperm.xlu0 %330, %v269
      %v332 = vpop.permute.xlu0 %331
      %335 = vset.pattern.permute.xlu0 0
      %336 = vperm.xlu0 %335, %v270
      %v337 = vpop.permute.xlu0 %336
      %340 = vset.pattern.permute.xlu0 0
      %341 = vperm.xlu0 %340, %v271
      %v342 = vpop.permute.xlu0 %341
      %345 = vset.pattern.permute.xlu0 0
      %346 = vperm.xlu0 %345, %v272
      %v347 = vpop.permute.xlu0 %346
      %350 = vset.pattern.permute.xlu0 0
      %351 = vperm.xlu0 %350, %v273
      %v352 = vpop.permute.xlu0 %351
      %354 = vmatprep.subr.mxu0 %v257
      %355 = vmatpush1.msra.mxu0 %v256
      %356 = vmatprep.subr.mxu0 %v255
      %357 = vmatpush1.msra.mxu0 %v254
      %358 = vmatprep.subr.mxu0 %v253
      %359 = vmatpush1.msra.mxu0 %v252
      %360 = vmatprep.subr.mxu0 %v251
      %361 = vmatpush1.msra.mxu0 %v250
      %362 = vmatprep.subr.mxu0 %v249
      %363 = vmatpush1.msra.mxu0 %v248
      %364 = vmatprep.subr.mxu0 %v247
      %365 = vmatpush1.msra.mxu0 %v246
      %366 = vmatprep.subr.mxu0 %v245
      %367 = vmatpush1.msra.mxu0 %v244
      %368 = vmatprep.subr.mxu0 %v243
      %369 = vmatpush1.msra.mxu0 %v242
      %370 = vmatprep.subr.mxu0 %v241
      %371 = vmatpush1.msra.mxu0 %v240
      %372 = vmatprep.subr.mxu0 %v239
      %373 = vmatpush1.msra.mxu0 %v238
      %374 = vmatprep.subr.mxu0 %v237
      %375 = vmatpush1.msra.mxu0 %v236
      %376 = vmatprep.subr.mxu0 %v235
      %377 = vmatpush1.msra.mxu0 %v234
      %378 = vmatprep.subr.mxu0 %v233
      %379 = vmatpush1.msra.mxu0 %v232
      %380 = vmatprep.subr.mxu0 %v231
      %381 = vmatpush1.msra.mxu0 %v230
      %382 = vmatprep.subr.mxu0 %v229
      %383 = vmatpush1.msra.mxu0 %v228
      %384 = vmatprep.subr.mxu0 %v227
      %385 = vmatpush1.msra.mxu0 %v226
      %386 = vmatprep.subr.mxu0 0.0
      %387 = vmatpush2.msra.mxu0 0.0
      %388 = vmatprep.subr.mxu0 0.0
      %389 = vmatpush2.msra.mxu0 0.0
      %390 = vmatprep.subr.mxu0 0.0
      %391 = vmatpush2.msra.mxu0 0.0
      %392 = vmatprep.subr.mxu0 0.0
      %393 = vmatpush2.msra.mxu0 0.0
      %394 = vmatprep.subr.mxu0 0.0
      %395 = vmatpush2.msra.mxu0 0.0
      %396 = vmatprep.subr.mxu0 0.0
      %397 = vmatpush2.msra.mxu0 0.0
      %398 = vmatprep.subr.mxu0 0.0
      %399 = vmatpush2.msra.mxu0 0.0
      %400 = vmatprep.subr.mxu0 0.0
      %401 = vmatpush2.msra.mxu0 0.0
      %402 = vmatprep.subr.mxu0 0.0
      %403 = vmatpush2.msra.mxu0 0.0
      %404 = vmatprep.subr.mxu0 0.0
      %405 = vmatpush2.msra.mxu0 0.0
      %406 = vmatprep.subr.mxu0 0.0
      %407 = vmatpush2.msra.mxu0 0.0
      %408 = vmatprep.subr.mxu0 0.0
      %409 = vmatpush2.msra.mxu0 0.0
      %410 = vmatprep.subr.mxu0 0.0
      %411 = vmatpush2.msra.mxu0 0.0
      %412 = vmatprep.subr.mxu0 0.0
      %413 = vmatpush2.msra.mxu0 0.0
      %414 = vmatprep.subr.mxu0 0.0
      %415 = vmatpush2.msra.mxu0 0.0
      %416 = vmatprep.subr.mxu0 0.0
      %417 = vmatpush2.msra.mxu0 0.0
      %418 = vmatprep.mubr.f32.mxu0 0.0
      %419 = vmatmul.mubr.f32.gmra.mxu0 %v210
      %v420 = vpop.f32.mrf.mxu0
      %v421 = vadd.f32 %v277, %v420
      %v422 = vpop.f32.mrf.mxu0
      %v423 = vadd.f32 %v277, %v422
      %424 = vmatprep.mubr.f32.mxu0 0.0
      %425 = vmatmul.mubr.f32.gmra.mxu0 %v211
      %v426 = vpop.f32.mrf.mxu0
      %v427 = vadd.f32 %v282, %v426
      %v428 = vpop.f32.mrf.mxu0
      %v429 = vadd.f32 %v282, %v428
      %430 = vmatprep.mubr.f32.mxu0 0.0
      %431 = vmatmul.mubr.f32.gmra.mxu0 %v212
      %v432 = vpop.f32.mrf.mxu0
      %v433 = vadd.f32 %v287, %v432
      %v434 = vpop.f32.mrf.mxu0
      %v435 = vadd.f32 %v287, %v434
      %436 = vmatprep.mubr.f32.mxu0 0.0
      %437 = vmatmul.mubr.f32.gmra.mxu0 %v213
      %v438 = vpop.f32.mrf.mxu0
      %v439 = vadd.f32 %v292, %v438
      %v440 = vpop.f32.mrf.mxu0
      %v441 = vadd.f32 %v292, %v440
      %442 = vmatprep.mubr.f32.mxu0 0.0
      %443 = vmatmul.mubr.f32.gmra.mxu0 %v214
      %v444 = vpop.f32.mrf.mxu0
      %v445 = vadd.f32 %v297, %v444
      %v446 = vpop.f32.mrf.mxu0
      %v447 = vadd.f32 %v297, %v446
      %448 = vmatprep.mubr.f32.mxu0 0.0
      %449 = vmatmul.mubr.f32.gmra.mxu0 %v215
      %v450 = vpop.f32.mrf.mxu0
      %v451 = vadd.f32 %v302, %v450
      %v452 = vpop.f32.mrf.mxu0
      %v453 = vadd.f32 %v302, %v452
      %454 = vmatprep.mubr.f32.mxu0 0.0
      %455 = vmatmul.mubr.f32.gmra.mxu0 %v216
      %v456 = vpop.f32.mrf.mxu0
      %v457 = vadd.f32 %v307, %v456
      %v458 = vpop.f32.mrf.mxu0
      %v459 = vadd.f32 %v307, %v458
      %460 = vmatprep.mubr.f32.mxu0 0.0
      %461 = vmatmul.mubr.f32.gmra.mxu0 %v217
      %v462 = vpop.f32.mrf.mxu0
      %v463 = vadd.f32 %v312, %v462
      %v464 = vpop.f32.mrf.mxu0
      %v465 = vadd.f32 %v312, %v464
      %466 = vmatprep.mubr.f32.mxu0 0.0
      %467 = vmatmul.mubr.f32.gmra.mxu0 %v218
      %v468 = vpop.f32.mrf.mxu0
      %v469 = vadd.f32 %v317, %v468
      %v470 = vpop.f32.mrf.mxu0
      %v471 = vadd.f32 %v317, %v470
      %472 = vmatprep.mubr.f32.mxu0 0.0
      %473 = vmatmul.mubr.f32.gmra.mxu0 %v219
      %v474 = vpop.f32.mrf.mxu0
      %v475 = vadd.f32 %v322, %v474
      %v476 = vpop.f32.mrf.mxu0
      %v477 = vadd.f32 %v322, %v476
      %478 = vmatprep.mubr.f32.mxu0 0.0
      %479 = vmatmul.mubr.f32.gmra.mxu0 %v220
      %v480 = vpop.f32.mrf.mxu0
      %v481 = vadd.f32 %v327, %v480
      %v482 = vpop.f32.mrf.mxu0
      %v483 = vadd.f32 %v327, %v482
      %484 = vmatprep.mubr.f32.mxu0 0.0
      %485 = vmatmul.mubr.f32.gmra.mxu0 %v221
      %v486 = vpop.f32.mrf.mxu0
      %v487 = vadd.f32 %v332, %v486
      %v488 = vpop.f32.mrf.mxu0
      %v489 = vadd.f32 %v332, %v488
      %490 = vmatprep.mubr.f32.mxu0 0.0
      %491 = vmatmul.mubr.f32.gmra.mxu0 %v222
      %v492 = vpop.f32.mrf.mxu0
      %v493 = vadd.f32 %v337, %v492
      %v494 = vpop.f32.mrf.mxu0
      %v495 = vadd.f32 %v337, %v494
      %496 = vmatprep.mubr.f32.mxu0 0.0
      %497 = vmatmul.mubr.f32.gmra.mxu0 %v223
      %v498 = vpop.f32.mrf.mxu0
      %v499 = vadd.f32 %v342, %v498
      %v500 = vpop.f32.mrf.mxu0
      %v501 = vadd.f32 %v342, %v500
      %502 = vmatprep.mubr.f32.mxu0 0.0
      %503 = vmatmul.mubr.f32.gmra.mxu0 %v224
      %v504 = vpop.f32.mrf.mxu0
      %v505 = vadd.f32 %v347, %v504
      %v506 = vpop.f32.mrf.mxu0
      %v507 = vadd.f32 %v347, %v506
      %508 = vmatprep.mubr.f32.mxu0 0.0
      %509 = vmatmul.mubr.f32.gmra.mxu0 %v225
      %v510 = vpop.f32.mrf.mxu0
      %v511 = vadd.f32 %v352, %v510
      %v512 = vpop.f32.mrf.mxu0
      %v513 = vadd.f32 %v352, %v512
      %514 = vdwg.mxu0
      %v515 = vmax.f32 %v421, 0.0
      %v516 = vmax.f32 %v423, 0.0
      %v517 = vmax.f32 %v427, 0.0
      %v518 = vmax.f32 %v429, 0.0
      %v519 = vmax.f32 %v433, 0.0
      %v520 = vmax.f32 %v435, 0.0
      %v521 = vmax.f32 %v439, 0.0
      %v522 = vmax.f32 %v441, 0.0
      %v523 = vmax.f32 %v445, 0.0
      %v524 = vmax.f32 %v447, 0.0
      %v525 = vmax.f32 %v451, 0.0
      %v526 = vmax.f32 %v453, 0.0
      %v527 = vmax.f32 %v457, 0.0
      %v528 = vmax.f32 %v459, 0.0
      %v529 = vmax.f32 %v463, 0.0
      %v530 = vmax.f32 %v465, 0.0
      %v531 = vmax.f32 %v469, 0.0
      %v532 = vmax.f32 %v471, 0.0
      %v533 = vmax.f32 %v475, 0.0
      %v534 = vmax.f32 %v477, 0.0
      %v535 = vmax.f32 %v481, 0.0
      %v536 = vmax.f32 %v483, 0.0
      %v537 = vmax.f32 %v487, 0.0
      %v538 = vmax.f32 %v489, 0.0
      %v539 = vmax.f32 %v493, 0.0
      %v540 = vmax.f32 %v495, 0.0
      %v541 = vmax.f32 %v499, 0.0
      %v542 = vmax.f32 %v501, 0.0
      %v543 = vmax.f32 %v505, 0.0
      %v544 = vmax.f32 %v507, 0.0
      %v545 = vmax.f32 %v511, 0.0
      %v546 = vmax.f32 %v513, 0.0
      %547 = vset.pattern.permute.xlu0 1
      %548 = vperm.xlu0 %547, %v258
      %v549 = vpop.permute.xlu0 %548
      %551 = vset.pattern.permute.xlu0 1
      %552 = vperm.xlu0 %551, %v259
      %v553 = vpop.permute.xlu0 %552
      %555 = vset.pattern.permute.xlu0 1
      %556 = vperm.xlu0 %555, %v260
      %v557 = vpop.permute.xlu0 %556
      %559 = vset.pattern.permute.xlu0 1
      %560 = vperm.xlu0 %559, %v261
      %v561 = vpop.permute.xlu0 %560
      %563 = vset.pattern.permute.xlu0 1
      %564 = vperm.xlu0 %563, %v262
      %v565 = vpop.permute.xlu0 %564
      %567 = vset.pattern.permute.xlu0 1
      %568 = vperm.xlu0 %567, %v263
      %v569 = vpop.permute.xlu0 %568
      %571 = vset.pattern.permute.xlu0 1
      %572 = vperm.xlu0 %571, %v264
      %v573 = vpop.permute.xlu0 %572
      %575 = vset.pattern.permute.xlu0 1
      %576 = vperm.xlu0 %575, %v265
      %v577 = vpop.permute.xlu0 %576
      %579 = vset.pattern.permute.xlu0 1
      %580 = vperm.xlu0 %579, %v266
      %v581 = vpop.permute.xlu0 %580
      %583 = vset.pattern.permute.xlu0 1
      %584 = vperm.xlu0 %583, %v267
      %v585 = vpop.permute.xlu0 %584
      %587 = vset.pattern.permute.xlu0 1
      %588 = vperm.xlu0 %587, %v268
      %v589 = vpop.permute.xlu0 %588
      %591 = vset.pattern.permute.xlu0 1
      %592 = vperm.xlu0 %591, %v269
      %v593 = vpop.permute.xlu0 %592
      %595 = vset.pattern.permute.xlu0 1
      %596 = vperm.xlu0 %595, %v270
      %v597 = vpop.permute.xlu0 %596
      %599 = vset.pattern.permute.xlu0 1
      %600 = vperm.xlu0 %599, %v271
      %v601 = vpop.permute.xlu0 %600
      %603 = vset.pattern.permute.xlu0 1
      %604 = vperm.xlu0 %603, %v272
      %v605 = vpop.permute.xlu0 %604
      %607 = vset.pattern.permute.xlu0 1
      %608 = vperm.xlu0 %607, %v273
      %v609 = vpop.permute.xlu0 %608
      %v611 = vmul.f32 %v515, %v549
      %v612 = vmul.f32 %v516, %v549
      %v613 = vmul.f32 %v517, %v553
      %v614 = vmul.f32 %v518, %v553
      %v615 = vmul.f32 %v519, %v557
      %v616 = vmul.f32 %v520, %v557
      %v617 = vmul.f32 %v521, %v561
      %v618 = vmul.f32 %v522, %v561
      %v619 = vmul.f32 %v523, %v565
      %v620 = vmul.f32 %v524, %v565
      %v621 = vmul.f32 %v525, %v569
      %v622 = vmul.f32 %v526, %v569
      %v623 = vmul.f32 %v527, %v573
      %v624 = vmul.f32 %v528, %v573
      %v625 = vmul.f32 %v529, %v577
      %v626 = vmul.f32 %v530, %v577
      %v627 = vmul.f32 %v531, %v581
      %v628 = vmul.f32 %v532, %v581
      %v629 = vmul.f32 %v533, %v585
      %v630 = vmul.f32 %v534, %v585
      %v631 = vmul.f32 %v535, %v589
      %v632 = vmul.f32 %v536, %v589
      %v633 = vmul.f32 %v537, %v593
      %v634 = vmul.f32 %v538, %v593
      %v635 = vmul.f32 %v539, %v597
      %v636 = vmul.f32 %v540, %v597
      %v637 = vmul.f32 %v541, %v601
      %v638 = vmul.f32 %v542, %v601
      %v639 = vmul.f32 %v543, %v605
      %v640 = vmul.f32 %v544, %v605
      %v641 = vmul.f32 %v545, %v609
      %v642 = vmul.f32 %v546, %v609
      %643 = vset.pattern.permute.xlu0 2
      %644 = vperm.xlu0 %643, %v258
      %v645 = vpop.permute.xlu0 %644
      %647 = vset.pattern.permute.xlu0 2
      %648 = vperm.xlu0 %647, %v259
      %v649 = vpop.permute.xlu0 %648
      %651 = vset.pattern.permute.xlu0 2
      %652 = vperm.xlu0 %651, %v260
      %v653 = vpop.permute.xlu0 %652
      %655 = vset.pattern.permute.xlu0 2
      %656 = vperm.xlu0 %655, %v261
      %v657 = vpop.permute.xlu0 %656
      %659 = vset.pattern.permute.xlu0 2
      %660 = vperm.xlu0 %659, %v262
      %v661 = vpop.permute.xlu0 %660
      %663 = vset.pattern.permute.xlu0 2
      %664 = vperm.xlu0 %663, %v263
      %v665 = vpop.permute.xlu0 %664
      %667 = vset.pattern.permute.xlu0 2
      %668 = vperm.xlu0 %667, %v264
      %v669 = vpop.permute.xlu0 %668
      %671 = vset.pattern.permute.xlu0 2
      %672 = vperm.xlu0 %671, %v265
      %v673 = vpop.permute.xlu0 %672
      %675 = vset.pattern.permute.xlu0 2
      %676 = vperm.xlu0 %675, %v266
      %v677 = vpop.permute.xlu0 %676
      %679 = vset.pattern.permute.xlu0 2
      %680 = vperm.xlu0 %679, %v267
      %v681 = vpop.permute.xlu0 %680
      %683 = vset.pattern.permute.xlu0 2
      %684 = vperm.xlu0 %683, %v268
      %v685 = vpop.permute.xlu0 %684
      %687 = vset.pattern.permute.xlu0 2
      %688 = vperm.xlu0 %687, %v269
      %v689 = vpop.permute.xlu0 %688
      %691 = vset.pattern.permute.xlu0 2
      %692 = vperm.xlu0 %691, %v270
      %v693 = vpop.permute.xlu0 %692
      %695 = vset.pattern.permute.xlu0 2
      %696 = vperm.xlu0 %695, %v271
      %v697 = vpop.permute.xlu0 %696
      %699 = vset.pattern.permute.xlu0 2
      %700 = vperm.xlu0 %699, %v272
      %v701 = vpop.permute.xlu0 %700
      %703 = vset.pattern.permute.xlu0 2
      %704 = vperm.xlu0 %703, %v273
      %v705 = vpop.permute.xlu0 %704
      %v707 = vadd.f32 %v611, %v645
      %v708 = vadd.f32 %v612, %v645
      %v709 = vadd.f32 %v613, %v649
      %v710 = vadd.f32 %v614, %v649
      %v711 = vadd.f32 %v615, %v653
      %v712 = vadd.f32 %v616, %v653
      %v713 = vadd.f32 %v617, %v657
      %v714 = vadd.f32 %v618, %v657
      %v715 = vadd.f32 %v619, %v661
      %v716 = vadd.f32 %v620, %v661
      %v717 = vadd.f32 %v621, %v665
      %v718 = vadd.f32 %v622, %v665
      %v719 = vadd.f32 %v623, %v669
      %v720 = vadd.f32 %v624, %v669
      %v721 = vadd.f32 %v625, %v673
      %v722 = vadd.f32 %v626, %v673
      %v723 = vadd.f32 %v627, %v677
      %v724 = vadd.f32 %v628, %v677
      %v725 = vadd.f32 %v629, %v681
      %v726 = vadd.f32 %v630, %v681
      %v727 = vadd.f32 %v631, %v685
      %v728 = vadd.f32 %v632, %v685
      %v729 = vadd.f32 %v633, %v689
      %v730 = vadd.f32 %v634, %v689
      %v731 = vadd.f32 %v635, %v693
      %v732 = vadd.f32 %v636, %v693
      %v733 = vadd.f32 %v637, %v697
      %v734 = vadd.f32 %v638, %v697
      %v735 = vadd.f32 %v639, %v701
      %v736 = vadd.f32 %v640, %v701
      %v737 = vadd.f32 %v641, %v705
      %v738 = vadd.f32 %v642, %v705
      %739 = vst [vmem:[%s208] sm:$0xff] %v707
      %740 = vst [vmem:[%s208 + $0x8] sm:$0xff] %v708
      %741 = vst [vmem:[%s208 + $0x10] sm:$0xff] %v709
      %742 = vst [vmem:[%s208 + $0x18] sm:$0xff] %v710
      %743 = vst [vmem:[%s208 + $0x20] sm:$0xff] %v711
      %744 = vst [vmem:[%s208 + $0x28] sm:$0xff] %v712
      %745 = vst [vmem:[%s208 + $0x30] sm:$0xff] %v713
      %746 = vst [vmem:[%s208 + $0x38] sm:$0xff] %v714
      %747 = vst [vmem:[%s208 + $0x40] sm:$0xff] %v715
      %748 = vst [vmem:[%s208 + $0x48] sm:$0xff] %v716
      %749 = vst [vmem:[%s208 + $0x50] sm:$0xff] %v717
      %750 = vst [vmem:[%s208 + $0x58] sm:$0xff] %v718
      %751 = vst [vmem:[%s208 + $0x60] sm:$0xff] %v719
      %752 = vst [vmem:[%s208 + $0x68] sm:$0xff] %v720
      %753 = vst [vmem:[%s208 + $0x70] sm:$0xff] %v721
      %754 = vst [vmem:[%s208 + $0x78] sm:$0xff] %v722
      %755 = vst [vmem:[%s208 + $0x80] sm:$0xff] %v723
      %756 = vst [vmem:[%s208 + $0x88] sm:$0xff] %v724
      %757 = vst [vmem:[%s208 + $0x90] sm:$0xff] %v725
      %758 = vst [vmem:[%s208 + $0x98] sm:$0xff] %v726
      %759 = vst [vmem:[%s208 + $0xa0] sm:$0xff] %v727
      %760 = vst [vmem:[%s208 + $0xa8] sm:$0xff] %v728
      %761 = vst [vmem:[%s208 + $0xb0] sm:$0xff] %v729
      %762 = vst [vmem:[%s208 + $0xb8] sm:$0xff] %v730
      %763 = vst [vmem:[%s208 + $0xc0] sm:$0xff] %v731
      %764 = vst [vmem:[%s208 + $0xc8] sm:$0xff] %v732
      %765 = vst [vmem:[%s208 + $0xd0] sm:$0xff] %v733
      %766 = vst [vmem:[%s208 + $0xd8] sm:$0xff] %v734
      %767 = vst [vmem:[%s208 + $0xe0] sm:$0xff] %v735
      %768 = vst [vmem:[%s208 + $0xe8] sm:$0xff] %v736
      %769 = vst [vmem:[%s208 + $0xf0] sm:$0xff] %v737
      %770 = vst [vmem:[%s208 + $0xf8] sm:$0xff] %v738
      %s771 = smul.u32 2, %s19
      %p772 = scmp.lt.s32.totalorder %s18, 1
      %s773 = scalar_select %p772, %s18, 1
      %p774 = scmp.lt.s32.totalorder %s771, 1
      %s775 = scalar_select %p774, %s771, 1
      %s776 = smul.addr %s773, 32
      %s777 = sadd.s32 %s775, %s776
      %s778 = smul.addr %s777, 8
      %s779 = scalar_lea.vmem %s3, %s778
      // Predicated region
      $region33: #{conv_relu_bn.1} parent=31 // pred_check
        %p780 = pneg %p116
      $region34: #{conv_relu_bn.1} parent=31 // pred_check_branch
        %782 = sbr.rel (%p780) target = $region36
      $region35: #{conv_relu_bn.1} parent=31 // pred_region
        %s783 = smul.u32 2, %s19
      $region36: #{conv_relu_bn.1} parent=31 // pred_fallthru
        _
    $region32: #{conv_relu_bn.1} parent=5 // pred_fallthru
      _
    %p784 = scmp.le.s32.totalorder 2, %s9
    // Predicated region
    $region37: #{conv_relu_bn.1} parent=5 // pred_check
      %p785 = pneg %p784
    $region38: #{conv_relu_bn.1} parent=5 // pred_check_branch
      %787 = sbr.rel (%p785) target = $region40
    $region39: #{conv_relu_bn.1} parent=5 // pred_region
      %s788 = ssub.s32 %s9, 2
      // Predicated region
      $region41: #{conv_relu_bn.1} parent=39 // pred_check
        %p789 = pneg %p122
      $region42: #{conv_relu_bn.1} parent=39 // pred_check_branch
        %791 = sbr.rel (%p789) target = $region44
      $region43: #{conv_relu_bn.1} parent=39 // pred_region
        %s792 = smul.u32 2, %s21
        %p793 = scmp.lt.s32.totalorder %s20, 1
        %s794 = scalar_select %p793, %s20, 1
        %p795 = scmp.lt.s32.totalorder %s792, 1
        %s796 = scalar_select %p795, %s792, 1
        %s797 = smul.addr %s794, 32
        %s798 = sadd.s32 %s796, %s797
        %s799 = smul.addr %s798, 8
        %s800 = scalar_lea.vmem %s3, %s799
      $region44: #{conv_relu_bn.1} parent=39 // pred_fallthru
        _
    $region40: #{conv_relu_bn.1} parent=5 // pred_fallthru
      _
  $region6: #{conv_relu_bn.1} parent=0 // loop_footer
    %s13 = sadd.s32 1, %s9
  $region7: #{conv_relu_bn.1} parent=0 // loop_footer_branch
    %8 = sbr.rel target = $region3
  $region8: #{conv_relu_bn.1} parent=0 // loop_exit
    _

</llo_original>
